<compile_context>
chip_gen: v6e
topology: v6e:2x2x1
jax: 0.10.0
libtpu: 0.0.40
codegen_flags: <defaults>
</compile_context>

<pallas_src>
import math

import jax
import jax.numpy as jnp
from jax.experimental import pallas as pl
from jax.experimental.pallas import tpu as pltpu


def _forward_kernel(x_ref, y_ref, ld_ref, acc_ref):
    i = pl.program_id(1)

    @pl.when(i == 0)
    def _():
        acc_ref[...] = jnp.zeros_like(acc_ref)

    x = x_ref[...].astype(jnp.float32)
    ax = jnp.abs(x)
    e = jnp.exp(-ax)                        # single shared transcendental (EUP)
    d = 1.0 + e
    inv = pl.reciprocal(d, approx=True)     # EUP vrcp
    inv = inv * (2.0 - d * inv)             # Newton step (VPU only)
    inv = inv * (2.0 - d * inv)             # second step -> f32-accurate 1/(1+e)
    y = jnp.where(x >= 0, inv, e * inv)     # sigmoid(x)
    y_ref[...] = y.astype(y_ref.dtype)

    # -softplus(x) - softplus(-x) == -(|x| + 2*log1p(exp(-|x|)))
    ld_tile = -(ax + 2.0 * jnp.log1p(e))
    acc_ref[...] += jnp.sum(ld_tile, axis=-1, keepdims=True)

    @pl.when(i == pl.num_programs(1) - 1)
    def _():
        ld_ref[...] = acc_ref[...]


def _reverse_kernel(x_ref, y_ref, ld_ref, acc_ref):
    i = pl.program_id(1)

    @pl.when(i == 0)
    def _():
        acc_ref[...] = jnp.zeros_like(acc_ref)

    x = x_ref[...].astype(jnp.float32)
    lx = jnp.log(x)
    l1mx = jnp.log1p(-x)                    # stable log(1 - x)
    y_ref[...] = (lx - l1mx).astype(y_ref.dtype)   # logit(x)
    acc_ref[...] += jnp.sum(-(lx + l1mx), axis=-1, keepdims=True)

    @pl.when(i == pl.num_programs(1) - 1)
    def _():
        ld_ref[...] = acc_ref[...]


def _pick_tile(extent, candidates):
    for c in candidates:
        if c <= extent and extent % c == 0:
            return c
    return extent


def flow_sigmoid(x, reverse=False):
    """x: (B, C, H, W) (any trailing dims) -> (y: x.shape, logdet: (B,))."""
    B = x.shape[0]
    N = math.prod(x.shape[1:])

    # Fold a factor R of N into the row dim so the sublane dim is a multiple of 8
    # (full vreg utilization for small batches); row-major order is preserved.
    R = 1
    if B % 8 != 0:
        need = 8 // math.gcd(B, 8)
        if N % need == 0:
            R = need
    rows = B * R
    inner = N // R

    # Lane dim a multiple of 128 (unmasked vst); cap keeps double-buffered
    # in+out tiles (<= 4 MiB/buffer) far under v7x's 32 MiB scoped VMEM default.
    TN = _pick_tile(inner, (2048, 1024, 512, 256, 128))
    TB = _pick_tile(rows, (256, 128, 64, 32, 16, 8))
    n_row_blocks = rows // TB
    n_col_blocks = inner // TN

    x2 = x.reshape(rows, inner)
    kernel = _reverse_kernel if reverse else _forward_kernel

    itemsize = jnp.dtype(x.dtype).itemsize
    cost = pl.CostEstimate(
        flops=8 * rows * inner,
        transcendentals=(2 if reverse else 3) * rows * inner,
        bytes_accessed=2 * rows * inner * itemsize + rows * 4,
    )

    y2, ld_rows = pl.pallas_call(
        kernel,
        out_shape=(
            jax.ShapeDtypeStruct((rows, inner), x.dtype),
            jax.ShapeDtypeStruct((rows, 1), jnp.float32),
        ),
        grid_spec=pltpu.PrefetchScalarGridSpec(
            num_scalar_prefetch=0,
            grid=(n_row_blocks, n_col_blocks),
            in_specs=[pl.BlockSpec((TB, TN), lambda b, i: (b, i))],
            out_specs=(
                pl.BlockSpec((TB, TN), lambda b, i: (b, i)),
                pl.BlockSpec((TB, 1), lambda b, i: (b, 0)),
            ),
            scratch_shapes=[pltpu.VMEM((TB, 1), jnp.float32)],
        ),
        compiler_params=pltpu.CompilerParams(
            dimension_semantics=("parallel", "arbitrary"),
        ),
        cost_estimate=cost,
    )(x2)

    y = y2.reshape(x.shape)
    logdet = jnp.sum(ld_rows.reshape(B, R), axis=1)
    return y, logdet


def _reference(x, reverse=False):
    # pure-JAX reference mirroring the PyTorch semantics
    B = x.shape[0]
    xf = x.astype(jnp.float32)
    if reverse:
        y = -jnp.log(1.0 / xf - 1.0)
        ld = -jnp.log(xf) - jnp.log(1.0 - xf)
    else:
        y = jax.nn.sigmoid(xf)
        ld = -jax.nn.softplus(xf) - jax.nn.softplus(-xf)
    return y.astype(x.dtype), jnp.sum(ld.reshape(B, -1), axis=1)


if __name__ == "__main__":
    key = jax.random.PRNGKey(0)
    x = jax.random.normal(key, (2, 4, 16, 16), dtype=jnp.float32)

    # forward pass
    y, logdet = flow_sigmoid(x, reverse=False)
    jax.block_until_ready((y, logdet))
    y_ref, ld_ref = _reference(x, reverse=False)
    assert jnp.allclose(y, y_ref, atol=1e-5), "forward y mismatch"
    assert jnp.allclose(logdet, ld_ref, atol=1e-3, rtol=1e-5), "forward logdet mismatch"

    # reverse pass (input must lie in (0, 1))
    x_rev = jax.nn.sigmoid(x)
    y2, logdet2 = flow_sigmoid(x_rev, reverse=True)
    jax.block_until_ready((y2, logdet2))
    y2_ref, ld2_ref = _reference(x_rev, reverse=True)
    assert jnp.allclose(y2, y2_ref, atol=1e-4), "reverse y mismatch"
    assert jnp.allclose(logdet2, ld2_ref, atol=1e-3, rtol=1e-5), "reverse logdet mismatch"

    print("KERNEL_OK")
</pallas_src>

<mosaic_0001>
module attributes {stable_mosaic.version = 11 : i64} {
  func.func @_forward_kernel(%arg0: i32, %arg1: i32, %arg2: memref<8x256xf32, #tpu.memory_space<vmem>>, %arg3: memref<8x256xf32, #tpu.memory_space<vmem>>, %arg4: memref<8x1xf32, #tpu.memory_space<vmem>>, %arg5: memref<8x1xf32, #tpu.memory_space<vmem>>) attributes {dimension_semantics = [#tpu.dimension_semantics<parallel>, #tpu.dimension_semantics<arbitrary>], iteration_bounds = array<i64: 1, 1>, scalar_prefetch = 0 : i64, scratch_operands = 1 : i64, tpu.core_type = #tpu.core_type<tc>, window_params = [{transform_indices = @transform_0, window_bounds = array<i64: 8, 256>}, {transform_indices = @transform_1, window_bounds = array<i64: 8, 256>}, {transform_indices = @transform_2, window_bounds = array<i64: 8, 1>}]} {
    %c0_i32 = arith.constant 0 : i32
    %0 = arith.cmpi eq, %arg1, %c0_i32 : i32
    %1 = arith.extui %0 : i1 to i32
    %c0_i32_0 = arith.constant 0 : i32
    %2 = arith.cmpi ne, %1, %c0_i32_0 : i32
    scf.if %2 {
      %cst_17 = arith.constant 0.000000e+00 : f32
      %38 = vector.broadcast %cst_17 : f32 to vector<8x1xf32>
      %c0_18 = arith.constant 0 : index
      %c0_19 = arith.constant 0 : index
      %39 = vector.load %arg5[%c0_18, %c0_19] : memref<8x1xf32, #tpu.memory_space<vmem>>, vector<8x1xf32>
      tpu.vector_store %arg5[%c0_18, %c0_19], %38 {strides = array<i32>} : memref<8x1xf32, #tpu.memory_space<vmem>>, vector<8x1xf32>,
    } else {
    }
    %c0 = arith.constant 0 : index
    %c0_1 = arith.constant 0 : index
    %3 = vector.load %arg2[%c0, %c0_1] : memref<8x256xf32, #tpu.memory_space<vmem>>, vector<8x256xf32>
    %4 = math.absf %3 : vector<8x256xf32>
    %cst = arith.constant 0.000000e+00 : f32
    %5 = vector.broadcast %cst : f32 to vector<8x256xf32>
    %6 = arith.subf %5, %4 : vector<8x256xf32>
    %7 = math.exp %6 : vector<8x256xf32>
    %cst_2 = arith.constant 1.000000e+00 : f32
    %8 = vector.broadcast %cst_2 : f32 to vector<8x256xf32>
    %9 = arith.addf %8, %7 : vector<8x256xf32>
    %10 = tpu.reciprocal %9 {approx = true} : vector<8x256xf32> -> vector<8x256xf32>
    %11 = arith.mulf %9, %10 : vector<8x256xf32>
    %cst_3 = arith.constant 2.000000e+00 : f32
    %12 = vector.broadcast %cst_3 : f32 to vector<8x256xf32>
    %13 = arith.subf %12, %11 : vector<8x256xf32>
    %14 = arith.mulf %10, %13 : vector<8x256xf32>
    %15 = arith.mulf %9, %14 : vector<8x256xf32>
    %cst_4 = arith.constant 2.000000e+00 : f32
    %16 = vector.broadcast %cst_4 : f32 to vector<8x256xf32>
    %17 = arith.subf %16, %15 : vector<8x256xf32>
    %18 = arith.mulf %14, %17 : vector<8x256xf32>
    %cst_5 = arith.constant 0.000000e+00 : f32
    %19 = vector.broadcast %cst_5 : f32 to vector<8x256xf32>
    %20 = arith.cmpf oge, %3, %19 : vector<8x256xf32>
    %21 = arith.mulf %7, %18 : vector<8x256xf32>
    %22 = arith.select %20, %18, %21 : vector<8x256xi1>, vector<8x256xf32>
    %c0_6 = arith.constant 0 : index
    %c0_7 = arith.constant 0 : index
    %23 = vector.load %arg3[%c0_6, %c0_7] : memref<8x256xf32, #tpu.memory_space<vmem>>, vector<8x256xf32>
    tpu.vector_store %arg3[%c0_6, %c0_7], %22 {strides = array<i32>} : memref<8x256xf32, #tpu.memory_space<vmem>>, vector<8x256xf32>,
    %24 = math.log1p %7 : vector<8x256xf32>
    %cst_8 = arith.constant 2.000000e+00 : f32
    %25 = vector.broadcast %cst_8 : f32 to vector<8x256xf32>
    %26 = arith.mulf %25, %24 : vector<8x256xf32>
    %27 = arith.addf %4, %26 : vector<8x256xf32>
    %cst_9 = arith.constant 0.000000e+00 : f32
    %28 = vector.broadcast %cst_9 : f32 to vector<8x256xf32>
    %29 = arith.subf %28, %27 : vector<8x256xf32>
    %c0_10 = arith.constant 0 : index
    %c0_11 = arith.constant 0 : index
    %30 = vector.load %arg5[%c0_10, %c0_11] : memref<8x1xf32, #tpu.memory_space<vmem>>, vector<8x1xf32>
    %cst_12 = arith.constant dense<0.000000e+00> : vector<8xf32>
    %31 = vector.multi_reduction <add>, %29, %cst_12 [1] : vector<8x256xf32> to vector<8xf32>
    %32 = vector.shape_cast %31 : vector<8xf32> to vector<8x1xf32>
    %33 = arith.addf %30, %32 : vector<8x1xf32>
    %c0_13 = arith.constant 0 : index
    %c0_14 = arith.constant 0 : index
    %34 = vector.load %arg5[%c0_13, %c0_14] : memref<8x1xf32, #tpu.memory_space<vmem>>, vector<8x1xf32>
    tpu.vector_store %arg5[%c0_13, %c0_14], %33 {strides = array<i32>} : memref<8x1xf32, #tpu.memory_space<vmem>>, vector<8x1xf32>,
    %c0_i32_15 = arith.constant 0 : i32
    %35 = arith.cmpi eq, %arg1, %c0_i32_15 : i32
    %36 = arith.extui %35 : i1 to i32
    %c0_i32_16 = arith.constant 0 : i32
    %37 = arith.cmpi ne, %36, %c0_i32_16 : i32
    scf.if %37 {
      %c0_17 = arith.constant 0 : index
      %c0_18 = arith.constant 0 : index
      %38 = vector.load %arg5[%c0_17, %c0_18] : memref<8x1xf32, #tpu.memory_space<vmem>>, vector<8x1xf32>
      %c0_19 = arith.constant 0 : index
      %c0_20 = arith.constant 0 : index
      %39 = vector.load %arg4[%c0_19, %c0_20] : memref<8x1xf32, #tpu.memory_space<vmem>>, vector<8x1xf32>
      tpu.vector_store %arg4[%c0_19, %c0_20], %38 {strides = array<i32>} : memref<8x1xf32, #tpu.memory_space<vmem>>, vector<8x1xf32>,
    } else {
    }
    return
  }
  func.func @transform_0(%arg0: i32, %arg1: i32) -> (i32, i32) {
    %c0_i32 = arith.constant 0 : i32
    return %arg0, %arg1 : i32, i32
  }
  func.func @transform_1(%arg0: i32, %arg1: i32) -> (i32, i32) {
    %c0_i32 = arith.constant 0 : i32
    return %arg0, %arg1 : i32, i32
  }
  func.func @transform_2(%arg0: i32, %arg1: i32) -> (i32, i32) {
    %c0_i32 = arith.constant 0 : i32
    %c0_i32_0 = arith.constant 0 : i32
    return %arg0, %c0_i32 : i32, i32
  }
}

</mosaic_0001>

<llo_original>
// kernel: tpu_custom_call.1
$region0: #{tpu_custom_call.1}
  #allocation0 [shape = 'u32[]', space=smem, size = 0x4, offset = 0x4, fixed_abs, tag = 'smem constant byte address 0x4 - core index']
  #allocation1 [shape = 'u32[144,128]{1,0:T(1,128)}', space=vmem, size = 0x12000, scoped, tag = 'internal scratch']
  #allocation2 [shape = 'f32[8,1]{1,0:T(8,128)}', space=vmem, size = 0x1000, scoped, tag = 'scratch operand']
  %s0 = inlined_call_operand.hbm [shape: f32[8,256], index: 0, kind: input, shape index: {}]
  %s1 = inlined_call_operand.hbm [shape: f32[8,256], index: 1, kind: output, shape index: {0}]
  %s2 = inlined_call_operand.vmem [shape: f32[8,1], index: 2, kind: output, shape index: {1}]
  %3 = xla_tuple %s1, %s2
  %s4 = sld [smem:[#allocation0]]
  $region34: #{tpu_custom_call.1} parent=0
    _
  %s6 = ssub.s32 1, %s4
  %s7 = scalar_select 0, %s6, %s4
  $region1: #{tpu_custom_call.1} parent=0
    #allocation3 [shape = 'u8[8192]{0}', space=vmem, size = 0x2000, scoped, tag = 'input window, operand 0, single buffered']
    #allocation4 [shape = 's32[1]{0}', space=sflag, size = 0x4, scoped, tag = 'scoped memory for tpu_custom_call.1']
    #allocation5 [shape = 's32[1]{0}', space=sflag, size = 0x4, scoped, tag = 'scoped memory for tpu_custom_call.1']
    #allocation6 [shape = 'u8[8192]{0}', space=vmem, size = 0x2000, scoped, tag = 'output window, operand 0, single buffered']
    %8 = vsyncpa [#allocation4], 0
    %9 = vsyncpa [#allocation5], 0
    // Predicated region
    $region2: #{tpu_custom_call.1} parent=1 // pred_check
      _
    $region3: #{tpu_custom_call.1} parent=1 // pred_check_branch
      %11 = sbr.rel (0) target = $region5
    $region4: #{tpu_custom_call.1} parent=1 // pred_region
      %s13 = ssub.s32 256, 256
      %14 = vsyncadd [#allocation4], %s13
      %s16 = sshll.u32 [#allocation3], 4
      %s17 = int_to_ptr.vmem [resolvable:$true] %s16
      %19 = dma.hbm_to_vmem [thread:$0]  %s0, 256, %s17, [#allocation4]
    $region5: #{tpu_custom_call.1} parent=1 // pred_fallthru
      _
    // Predicated region
    $region6: #{tpu_custom_call.1} parent=1 // pred_check
      _
    $region7: #{tpu_custom_call.1} parent=1 // pred_check_branch
      %21 = sbr.rel (0) target = $region9
    $region8: #{tpu_custom_call.1} parent=1 // pred_region
      %22 = dma.done [#allocation4], 256
    $region9: #{tpu_custom_call.1} parent=1 // pred_fallthru
      _
    %p23 = scmp.eq.s32.totalorder 0, 0
    // Predicated region
    $region10: #{tpu_custom_call.1} parent=1 // pred_check
      %p24 = pneg %p23
    $region11: #{tpu_custom_call.1} parent=1 // pred_check_branch
      %26 = sbr.rel (%p24) target = $region13
    $region12: #{tpu_custom_call.1} parent=1 // pred_region
      %vm27 = vcmask 7168
      %28 = vst.msk [vmem:[#allocation2] sm:$0xff] %vm27, 0.0
    $region13: #{tpu_custom_call.1} parent=1 // pred_fallthru
      _
    %v29 = vld [vmem:[#allocation3] sm:$0xff]
    %v30 = vld [vmem:[#allocation3 + $0x8] sm:$0xff]
    %v31 = vand.u32 2147483647, %v29
    %v32 = vand.u32 2147483647, %v30
    %v33 = vsub.f32 0.0, %v31
    %v34 = vsub.f32 0.0, %v32
    %v35 = vmul.f32 %v33, 1.442695
    %v36 = vpow.pop %v35
    %v37 = vmul.f32 %v34, 1.442695
    %v38 = vpow.pop %v37
    %v39 = vadd.f32 %v36, 1.0
    %v40 = vadd.f32 %v38, 1.0
    %v41 = vrcp.pop %v39
    %v42 = vrcp.pop %v40
    %v43 = vmul.f32 %v39, %v41
    %v44 = vmul.f32 %v40, %v42
    %v45 = vsub.f32 2.0, %v43
    %v46 = vsub.f32 2.0, %v44
    %v47 = vmul.f32 %v41, %v45
    %v48 = vmul.f32 %v42, %v46
    %v49 = vmul.f32 %v39, %v47
    %v50 = vmul.f32 %v40, %v48
    %v51 = vsub.f32 2.0, %v49
    %v52 = vsub.f32 2.0, %v50
    %v53 = vmul.f32 %v47, %v51
    %v54 = vmul.f32 %v48, %v52
    %vm55 = vcmp.ge.f32.partialorder %v29, 0.0
    %vm56 = vcmp.ge.f32.partialorder %v30, 0.0
    %v57 = vmul.f32 %v36, %v53
    %v58 = vmul.f32 %v38, %v54
    %v59 = vsel %vm55, %v53, %v57
    %v60 = vsel %vm56, %v54, %v58
    %61 = vst [vmem:[#allocation6] sm:$0xff] %v59
    %62 = vst [vmem:[#allocation6 + $0x8] sm:$0xff] %v60
    %v63 = vadd.f32 %v36, 1.0
    %v64 = vlog2.pop %v63
    %v65 = vmul.f32 %v64, 0.6931472
    %v66 = vmul.f32 -0.5, %v36
    %v67 = vadd.f32 %v66, 1.0
    %v68 = vmul.f32 %v67, %v36
    %v69 = vand.u32 2147483647, %v36
    %vm70 = vcmp.lt.f32.partialorder %v69, 0.0004427343
    %v71 = vsel %vm70, %v68, %v65
    %v72 = vadd.f32 %v38, 1.0
    %v73 = vlog2.pop %v72
    %v74 = vmul.f32 %v73, 0.6931472
    %v75 = vmul.f32 -0.5, %v38
    %v76 = vadd.f32 %v75, 1.0
    %v77 = vmul.f32 %v76, %v38
    %v78 = vand.u32 2147483647, %v38
    %vm79 = vcmp.lt.f32.partialorder %v78, 0.0004427343
    %v80 = vsel %vm79, %v77, %v74
    %v81 = vmul.f32 %v71, 2.0
    %v82 = vmul.f32 %v80, 2.0
    %v83 = vadd.f32 %v31, %v81
    %v84 = vadd.f32 %v32, %v82
    %v85 = vsub.f32 0.0, %v83
    %v86 = vsub.f32 0.0, %v84
    %v87 = vld [vmem:[#allocation2] sm:$0xff]
    %v88 = vadd.f32 %v85, %v86
    %89 = vadd.xlane.f32.xlu0 %v88
    %v90 = vpop.xlane.xlu0 %89
    %v91 = vadd.f32 %v87, %v90
    %vm92 = vcmask 7168
    %93 = vst.msk [vmem:[#allocation2] sm:$0xff] %vm92, %v91
    // Predicated region
    $region14: #{tpu_custom_call.1} parent=1 // pred_check
      %p94 = pneg %p23
    $region15: #{tpu_custom_call.1} parent=1 // pred_check_branch
      %96 = sbr.rel (%p94) target = $region17
    $region16: #{tpu_custom_call.1} parent=1 // pred_region
      %v97 = vld [vmem:[#allocation2] sm:$0xff]
      %98 = vst.msk [vmem:[%s2] sm:$0xff] %vm92, %v97
    $region17: #{tpu_custom_call.1} parent=1 // pred_fallthru
      _
    // Predicated region
    $region18: #{tpu_custom_call.1} parent=1 // pred_check
      _
    $region19: #{tpu_custom_call.1} parent=1 // pred_check_branch
      %100 = sbr.rel (0) target = $region21
    $region20: #{tpu_custom_call.1} parent=1 // pred_region
      %s102 = ssub.s32 256, 256
      %103 = vsyncadd [#allocation5], %s102
      %s105 = sshll.u32 [#allocation6], 4
      %s106 = int_to_ptr.vmem [resolvable:$true] %s105
      %108 = dma.vmem_to_hbm [thread:$0]  %s106, 256, %s1, [#allocation5]
    $region21: #{tpu_custom_call.1} parent=1 // pred_fallthru
      _
    // Predicated region
    $region22: #{tpu_custom_call.1} parent=1 // pred_check
      _
    $region23: #{tpu_custom_call.1} parent=1 // pred_check_branch
      %110 = sbr.rel (0) target = $region25
    $region24: #{tpu_custom_call.1} parent=1 // pred_region
      _
    $region25: #{tpu_custom_call.1} parent=1 // pred_fallthru
      _
    // Predicated region
    $region26: #{tpu_custom_call.1} parent=1 // pred_check
      _
    $region27: #{tpu_custom_call.1} parent=1 // pred_check_branch
      %112 = sbr.rel (0) target = $region29
    $region28: #{tpu_custom_call.1} parent=1 // pred_region
      %113 = dma.done [#allocation5], 256
    $region29: #{tpu_custom_call.1} parent=1 // pred_fallthru
      _
    // Predicated region
    $region30: #{tpu_custom_call.1} parent=1 // pred_check
      _
    $region31: #{tpu_custom_call.1} parent=1 // pred_check_branch
      %115 = sbr.rel (0) target = $region33
    $region32: #{tpu_custom_call.1} parent=1 // pred_region
      _
    $region33: #{tpu_custom_call.1} parent=1 // pred_fallthru
      _
    %116 = vsyncpa [#allocation4], 1
    %117 = vsyncpa [#allocation5], 1

</llo_original>
